<compile_context>
chip_gen: v6e
topology: v6e:2x2x1
jax: 0.10.0
libtpu: 0.0.40
codegen_flags: <defaults>
</compile_context>

<pallas_src>
import jax
import jax.numpy as jnp
from jax.experimental import pallas as pl
from jax.experimental.pallas import tpu as pltpu

_LANE = 128


def _round_up(x, m):
    return ((x + m - 1) // m) * m


def classifier_kernel(feat_ref, w1_ref, b1_ref, w2_ref, b2_ref, out_ref):
    """Fused MLP head: (x @ W1 + b1) -> ReLU -> (@ W2 + b2).

    Matmul operands are bf16 (MXU fast path), accumulation in f32; bias-add and
    ReLU run in f32 on the VPU (avoids bf16 elementwise, which v5e lacks).
    """
    x = feat_ref[...]                                                    # [TB, D_in] bf16
    h = jnp.dot(x, w1_ref[...], preferred_element_type=jnp.float32)     # [TB, H] f32
    h = h + b1_ref[...]                                                  # (1, H) f32 broadcast
    h = jnp.maximum(h, 0.0)                                              # ReLU (f32)
    # Dropout: identity in eval mode.
    h = h.astype(w2_ref.dtype)                                           # f32 -> bf16
    preds = jnp.dot(h, w2_ref[...], preferred_element_type=jnp.float32)  # [TB, C_pad] f32
    out_ref[...] = (preds + b2_ref[...]).astype(out_ref.dtype)


def classifier_forward(feat, w1, b1, w2, b2, *, block_b=512,
                       matmul_dtype=jnp.bfloat16):
    """feat: [B, D_in]; w1: [D_in, H]; b1: [1, H]; w2: [H, C]; b2: [1, C]."""
    B, D_in = feat.shape
    H = w1.shape[1]
    C = w2.shape[1]
    out_dtype = feat.dtype

    # Lane-dense output: pad narrow class dim to a 128-lane multiple (unmasked stores).
    C_pad = _round_up(C, _LANE)
    if C_pad != C:
        w2 = jnp.pad(w2, ((0, 0), (0, C_pad - C)))
        b2 = jnp.pad(b2, ((0, 0), (0, C_pad - C)))

    # bf16 matmul operands, f32 biases / accumulation.
    feat_mm = feat.astype(matmul_dtype)
    w1_mm = w1.astype(matmul_dtype)
    w2_mm = w2.astype(matmul_dtype)
    b1_f32 = b1.astype(jnp.float32)
    b2_f32 = b2.astype(jnp.float32)

    cost = pl.CostEstimate(
        flops=2 * B * (D_in * H + H * C_pad),
        transcendentals=0,
        bytes_accessed=(feat_mm.size * feat_mm.dtype.itemsize
                        + w1_mm.size * w1_mm.dtype.itemsize
                        + w2_mm.size * w2_mm.dtype.itemsize
                        + b1_f32.size * 4 + b2_f32.size * 4
                        + B * C_pad * jnp.dtype(out_dtype).itemsize),
    )

    if B <= block_b:
        # Tiny batch: no grid -- everything lives in VMEM as full-array blocks.
        vmem_spec = pl.BlockSpec(memory_space=pltpu.MemorySpace.VMEM)
        out = pl.pallas_call(
            classifier_kernel,
            out_shape=jax.ShapeDtypeStruct((B, C_pad), out_dtype),
            in_specs=[vmem_spec] * 5,
            out_specs=vmem_spec,
            cost_estimate=cost,
        )(feat_mm, w1_mm, b1_f32, w2_mm, b2_f32)
    else:
        # Large batch: tile batch axis; weights (constant index_map) stay VMEM-resident.
        # Feat+out double-buffered tiles are tiny (<< 32 MiB scoped VMEM even on v7x's
        # 64 MiB VMEM), so no vmem_limit_bytes override is needed at these widths.
        tb = block_b
        grid = (pl.cdiv(B, tb),)
        out = pl.pallas_call(
            classifier_kernel,
            out_shape=jax.ShapeDtypeStruct((B, C_pad), out_dtype),
            grid=grid,
            in_specs=[
                pl.BlockSpec((tb, D_in), lambda i: (i, 0)),
                pl.BlockSpec((D_in, H), lambda i: (0, 0)),
                pl.BlockSpec((1, H), lambda i: (0, 0)),
                pl.BlockSpec((H, C_pad), lambda i: (0, 0)),
                pl.BlockSpec((1, C_pad), lambda i: (0, 0)),
            ],
            out_specs=pl.BlockSpec((tb, C_pad), lambda i: (i, 0)),
            compiler_params=pltpu.CompilerParams(
                dimension_semantics=("parallel",)),
            cost_estimate=cost,
        )(feat_mm, w1_mm, b1_f32, w2_mm, b2_f32)

    return out[:, :C] if C_pad != C else out


def init_params(key, num_input, num_hidden, num_classes, dtype=jnp.float32):
    """Deterministic synthetic parameters (shapes match the PyTorch module)."""
    k1, k2, k3, k4 = jax.random.split(key, 4)
    # Stored as (in, out) == transpose of torch's (out, in) weight layout.
    w1 = jax.random.normal(k1, (num_input, num_hidden), dtype) * 0.05
    b1 = jax.random.normal(k2, (1, num_hidden), dtype) * 0.01
    w2 = jax.random.normal(k3, (num_hidden, num_classes), dtype) * 0.05
    b2 = jax.random.normal(k4, (1, num_classes), dtype) * 0.01
    return w1, b1, w2, b2


def reference_forward(feat, w1, b1, w2, b2):
    """Pure-JAX f32 reference (eval-mode dropout == identity)."""
    h = jnp.maximum(feat @ w1 + b1, 0.0)
    return h @ w2 + b2


if __name__ == "__main__":
    num_input, num_hidden, num_classes = 32, 64, 16
    key = jax.random.PRNGKey(0)
    k_feat, k_params, k_feat_big = jax.random.split(key, 3)
    w1, b1, w2, b2 = init_params(k_params, num_input, num_hidden, num_classes)

    # Small batch -> exercises the no-grid (pure-VMEM) path.
    B_small = 8
    feat = jax.random.normal(k_feat, (B_small, num_input), jnp.float32)
    preds = jax.block_until_ready(classifier_forward(feat, w1, b1, w2, b2))
    ref = reference_forward(feat, w1, b1, w2, b2)
    assert preds.shape == (B_small, num_classes)
    # bf16 matmul operands vs f32 reference -> loose tolerance.
    assert jnp.allclose(preds, ref, atol=2e-2, rtol=2e-2), (
        float(jnp.max(jnp.abs(preds - ref))))

    # Larger batch -> exercises the batch-tiled, weights-resident path.
    B_big = 2048
    feat_big = jax.random.normal(k_feat_big, (B_big, num_input), jnp.float32)
    preds_big = jax.block_until_ready(
        classifier_forward(feat_big, w1, b1, w2, b2, block_b=512))
    ref_big = reference_forward(feat_big, w1, b1, w2, b2)
    assert preds_big.shape == (B_big, num_classes)
    assert jnp.allclose(preds_big, ref_big, atol=2e-2, rtol=2e-2), (
        float(jnp.max(jnp.abs(preds_big - ref_big))))

    print("KERNEL_OK")
</pallas_src>

<mosaic_0001>
module attributes {stable_mosaic.version = 11 : i64} {
  func.func @classifier_kernel(%arg0: memref<8x32xbf16, #tpu.memory_space<vmem>>, %arg1: memref<32x64xbf16, #tpu.memory_space<vmem>>, %arg2: memref<1x64xf32, #tpu.memory_space<vmem>>, %arg3: memref<64x128xbf16, #tpu.memory_space<vmem>>, %arg4: memref<1x128xf32, #tpu.memory_space<vmem>>, %arg5: memref<8x128xf32, #tpu.memory_space<vmem>>) attributes {dimension_semantics = [], scalar_prefetch = 0 : i64, scratch_operands = 0 : i64, tpu.core_type = #tpu.core_type<tc>} {
    %c0 = arith.constant 0 : index
    %c0_0 = arith.constant 0 : index
    %0 = vector.load %arg0[%c0, %c0_0] : memref<8x32xbf16, #tpu.memory_space<vmem>>, vector<8x32xbf16>
    %c0_1 = arith.constant 0 : index
    %c0_2 = arith.constant 0 : index
    %1 = vector.load %arg1[%c0_1, %c0_2] : memref<32x64xbf16, #tpu.memory_space<vmem>>, vector<32x64xbf16>
    %cst = arith.constant dense<0.000000e+00> : vector<8x64xf32>
    %2 = tpu.matmul %0, %1, %cst {dimension_numbers = #tpu.dot_dimension_numbers<[1], [0], [0], [1], [0, 0, 1, 1], [], []>} : vector<8x32xbf16>, vector<32x64xbf16>, vector<8x64xf32> -> vector<8x64xf32>
    %c0_3 = arith.constant 0 : index
    %c0_4 = arith.constant 0 : index
    %3 = vector.load %arg2[%c0_3, %c0_4] : memref<1x64xf32, #tpu.memory_space<vmem>>, vector<1x64xf32>
    %4 = vector.broadcast %3 : vector<1x64xf32> to vector<8x64xf32>
    %5 = arith.addf %2, %4 : vector<8x64xf32>
    %cst_5 = arith.constant 0.000000e+00 : f32
    %6 = vector.broadcast %cst_5 : f32 to vector<8x64xf32>
    %7 = arith.maximumf %5, %6 : vector<8x64xf32>
    %8 = arith.truncf %7 : vector<8x64xf32> to vector<8x64xbf16>
    %c0_6 = arith.constant 0 : index
    %c0_7 = arith.constant 0 : index
    %9 = vector.load %arg3[%c0_6, %c0_7] : memref<64x128xbf16, #tpu.memory_space<vmem>>, vector<64x128xbf16>
    %cst_8 = arith.constant dense<0.000000e+00> : vector<8x128xf32>
    %10 = tpu.matmul %8, %9, %cst_8 {dimension_numbers = #tpu.dot_dimension_numbers<[1], [0], [0], [1], [0, 0, 1, 1], [], []>} : vector<8x64xbf16>, vector<64x128xbf16>, vector<8x128xf32> -> vector<8x128xf32>
    %c0_9 = arith.constant 0 : index
    %c0_10 = arith.constant 0 : index
    %11 = vector.load %arg4[%c0_9, %c0_10] : memref<1x128xf32, #tpu.memory_space<vmem>>, vector<1x128xf32>
    %12 = vector.broadcast %11 : vector<1x128xf32> to vector<8x128xf32>
    %13 = arith.addf %10, %12 : vector<8x128xf32>
    %c0_11 = arith.constant 0 : index
    %c0_12 = arith.constant 0 : index
    %14 = vector.load %arg5[%c0_11, %c0_12] : memref<8x128xf32, #tpu.memory_space<vmem>>, vector<8x128xf32>
    tpu.vector_store %arg5[%c0_11, %c0_12], %13 {strides = array<i32>} : memref<8x128xf32, #tpu.memory_space<vmem>>, vector<8x128xf32>,
    return
  }
}

</mosaic_0001>

<llo_original>
// kernel: tpu_custom_call.1
$region0: #{tpu_custom_call.1}
  #allocation0 [shape = 'u32[]', space=smem, size = 0x4, offset = 0x4, fixed_abs, tag = 'smem constant byte address 0x4 - core index']
  #allocation1 [shape = 'u32[144,128]{1,0:T(1,128)}', space=vmem, size = 0x12000, scoped, tag = 'internal scratch']
  %s0 = inlined_call_operand.hbm [shape: bf16[8,32], index: 0, kind: input, shape index: {}]
  %s1 = inlined_call_operand.hbm [shape: bf16[32,64], index: 1, kind: input, shape index: {}]
  %s2 = inlined_call_operand.vmem [shape: f32[1,64], index: 2, kind: input, shape index: {}]
  %s3 = inlined_call_operand.hbm [shape: bf16[64,128], index: 3, kind: input, shape index: {}]
  %s4 = inlined_call_operand.vmem [shape: f32[1,128], index: 4, kind: input, shape index: {}]
  %s5 = inlined_call_operand.hbm [shape: f32[8,128], index: 5, kind: output, shape index: {}]
  %s6 = sld [smem:[#allocation0]]
  $region42: #{tpu_custom_call.1} parent=0
    _
  %s8 = ssub.s32 1, %s6
  %s9 = scalar_select 0, %s8, %s6
  $region1: #{tpu_custom_call.1} parent=0
    #allocation2 [shape = 'u8[2048]{0}', space=vmem, size = 0x800, scoped, tag = 'input window, operand 0, single buffered']
    #allocation3 [shape = 's32[1]{0}', space=sflag, size = 0x4, scoped, tag = 'scoped memory for tpu_custom_call.1']
    #allocation4 [shape = 's32[1]{0}', space=sflag, size = 0x4, scoped, tag = 'scoped memory for tpu_custom_call.1']
    #allocation5 [shape = 'u8[8192]{0}', space=vmem, size = 0x2000, scoped, tag = 'input window, operand 1, single buffered']
    #allocation6 [shape = 's32[1]{0}', space=sflag, size = 0x4, scoped, tag = 'scoped memory for tpu_custom_call.1']
    #allocation7 [shape = 'u8[16384]{0}', space=vmem, size = 0x4000, scoped, tag = 'input window, operand 3, single buffered']
    #allocation8 [shape = 'u8[4096]{0}', space=vmem, size = 0x1000, scoped, tag = 'output window, operand 0, single buffered']
    %10 = vsyncpa [#allocation3], 0
    %11 = vsyncpa [#allocation6], 0
    %12 = vsyncpa [#allocation4], 0
    // Predicated region
    $region2: #{tpu_custom_call.1} parent=1 // pred_check
      _
    $region3: #{tpu_custom_call.1} parent=1 // pred_check_branch
      %14 = sbr.rel (0) target = $region5
    $region4: #{tpu_custom_call.1} parent=1 // pred_region
      %s16 = ssub.s32 64, 64
      %17 = vsyncadd [#allocation3], %s16
      %s19 = sshll.u32 [#allocation2], 4
      %s20 = int_to_ptr.vmem [resolvable:$true] %s19
      %22 = dma.hbm_to_vmem [thread:$0]  %s0, 64, %s20, [#allocation3]
    $region5: #{tpu_custom_call.1} parent=1 // pred_fallthru
      _
    // Predicated region
    $region6: #{tpu_custom_call.1} parent=1 // pred_check
      _
    $region7: #{tpu_custom_call.1} parent=1 // pred_check_branch
      %24 = sbr.rel (0) target = $region9
    $region8: #{tpu_custom_call.1} parent=1 // pred_region
      %s26 = ssub.s32 256, 256
      %27 = vsyncadd [#allocation6], %s26
      %s28 = sshll.u32 [#allocation5], 4
      %s29 = int_to_ptr.vmem [resolvable:$true] %s28
      %34 = dma.hbm_to_vmem [thread:$0]  %s1, 256, %s29, [#allocation6], 64, 64, 4
    $region9: #{tpu_custom_call.1} parent=1 // pred_fallthru
      _
    // Predicated region
    $region10: #{tpu_custom_call.1} parent=1 // pred_check
      _
    $region11: #{tpu_custom_call.1} parent=1 // pred_check_branch
      %36 = sbr.rel (0) target = $region13
    $region12: #{tpu_custom_call.1} parent=1 // pred_region
      _
    $region13: #{tpu_custom_call.1} parent=1 // pred_fallthru
      _
    // Predicated region
    $region14: #{tpu_custom_call.1} parent=1 // pred_check
      _
    $region15: #{tpu_custom_call.1} parent=1 // pred_check_branch
      %38 = sbr.rel (0) target = $region17
    $region16: #{tpu_custom_call.1} parent=1 // pred_region
      %s40 = ssub.s32 512, 512
      %41 = vsyncadd [#allocation6], %s40
      %s42 = sshll.u32 [#allocation7], 4
      %s43 = int_to_ptr.vmem [resolvable:$true] %s42
      %48 = dma.hbm_to_vmem [thread:$0]  %s3, 512, %s43, [#allocation6], 64, 64, 4
    $region17: #{tpu_custom_call.1} parent=1 // pred_fallthru
      _
    // Predicated region
    $region18: #{tpu_custom_call.1} parent=1 // pred_check
      _
    $region19: #{tpu_custom_call.1} parent=1 // pred_check_branch
      %50 = sbr.rel (0) target = $region21
    $region20: #{tpu_custom_call.1} parent=1 // pred_region
      _
    $region21: #{tpu_custom_call.1} parent=1 // pred_fallthru
      _
    // Predicated region
    $region22: #{tpu_custom_call.1} parent=1 // pred_check
      _
    $region23: #{tpu_custom_call.1} parent=1 // pred_check_branch
      %52 = sbr.rel (0) target = $region25
    $region24: #{tpu_custom_call.1} parent=1 // pred_region
      %53 = dma.done [#allocation3], 64
    $region25: #{tpu_custom_call.1} parent=1 // pred_fallthru
      _
    // Predicated region
    $region26: #{tpu_custom_call.1} parent=1 // pred_check
      _
    $region27: #{tpu_custom_call.1} parent=1 // pred_check_branch
      %55 = sbr.rel (0) target = $region29
    $region28: #{tpu_custom_call.1} parent=1 // pred_region
      %56 = dma.done [#allocation6], 256
    $region29: #{tpu_custom_call.1} parent=1 // pred_fallthru
      _
    // Predicated region
    $region30: #{tpu_custom_call.1} parent=1 // pred_check
      _
    $region31: #{tpu_custom_call.1} parent=1 // pred_check_branch
      %58 = sbr.rel (0) target = $region33
    $region32: #{tpu_custom_call.1} parent=1 // pred_region
      %59 = dma.done [#allocation6], 512
    $region33: #{tpu_custom_call.1} parent=1 // pred_fallthru
      _
    %v61 = vld [vmem:[#allocation2] sm:$0xf]
    %v62 = vld [vmem:[#allocation5] sm:$0xf]
    %v63 = vld [vmem:[#allocation5 + $0x4] sm:$0xf]
    %v64 = vld [vmem:[#allocation5 + $0x8] sm:$0xf]
    %v65 = vld [vmem:[#allocation5 + $0xc] sm:$0xf]
    %v66 = vld [vmem:[%s2] sm:$0x1]
    %v68 = vlaneseq
    %v69 = vshrl.u32 %v68, 7
    %v70 = vsub.s32 0, %v69
    %v71 = vrot.slane %v66, %v70
    %v77 = vunpack.c.l.b16 %v62
    %v78 = vunpack.c.l.b16 %v63
    %v79 = vunpack.c.l.b16 %v64
    %v80 = vunpack.c.l.b16 %v65
    %v81 = vpack.c.b16 %v78, %v77
    %v82 = vpack.c.b16 %v80, %v79
    %vm85 = vcmask 261120
    %v87 = vsel %vm85, %v61, 0
    %89 = vmatprep.subr.bf16.mxu0 0
    %90 = vmatpush1.bf16.msra.mxu0 0
    %91 = vmatprep.subr.bf16.mxu0 0
    %92 = vmatpush1.bf16.msra.mxu0 0
    %93 = vmatprep.subr.bf16.mxu0 0
    %94 = vmatpush1.bf16.msra.mxu0 0
    %95 = vmatprep.subr.bf16.mxu0 0
    %96 = vmatpush1.bf16.msra.mxu0 0
    %97 = vmatprep.subr.bf16.mxu0 0
    %98 = vmatpush1.bf16.msra.mxu0 0
    %99 = vmatprep.subr.bf16.mxu0 0
    %100 = vmatpush1.bf16.msra.mxu0 0
    %101 = vmatprep.subr.bf16.mxu0 0
    %102 = vmatpush1.bf16.msra.mxu0 %v82
    %103 = vmatprep.subr.bf16.mxu0 0
    %104 = vmatpush1.bf16.msra.mxu0 %v81
    %105 = vmatprep.subr.bf16.mxu0 0
    %106 = vmatpush2.bf16.msra.mxu0 0
    %107 = vmatprep.subr.bf16.mxu0 0
    %108 = vmatpush2.bf16.msra.mxu0 0
    %109 = vmatprep.subr.bf16.mxu0 0
    %110 = vmatpush2.bf16.msra.mxu0 0
    %111 = vmatprep.subr.bf16.mxu0 0
    %112 = vmatpush2.bf16.msra.mxu0 0
    %113 = vmatprep.subr.bf16.mxu0 0
    %114 = vmatpush2.bf16.msra.mxu0 0
    %115 = vmatprep.subr.bf16.mxu0 0
    %116 = vmatpush2.bf16.msra.mxu0 0
    %117 = vmatprep.subr.bf16.mxu0 0
    %118 = vmatpush2.bf16.msra.mxu0 0
    %119 = vmatprep.subr.bf16.mxu0 0
    %120 = vmatpush2.bf16.msra.mxu0 0
    %121 = vmatprep.mubr.bf16.mxu0 0
    %122 = vmatmul.mubr.bf16.gmra.mxu0 %v87
    %v123 = vpop.f32.mrf.mxu0
    %v124 = vadd.f32 %v71, %v123
    %v125 = vpop.f32.mrf.mxu0
    %v126 = vpop.f32.mrf.mxu0
    %v127 = vpop.f32.mrf.mxu0
    %128 = vdwg.mxu0
    %v129 = vmax.f32 %v124, 0.0
    %v130 = vpack.c.bf16 %v129, %v129
    %v131 = vld [vmem:[#allocation7] sm:$0xf]
    %v132 = vld [vmem:[#allocation7 + $0x4] sm:$0xf]
    %v133 = vld [vmem:[#allocation7 + $0x8] sm:$0xf]
    %v134 = vld [vmem:[#allocation7 + $0xc] sm:$0xf]
    %v135 = vld [vmem:[#allocation7 + $0x10] sm:$0xf]
    %v136 = vld [vmem:[#allocation7 + $0x14] sm:$0xf]
    %v137 = vld [vmem:[#allocation7 + $0x18] sm:$0xf]
    %v138 = vld [vmem:[#allocation7 + $0x1c] sm:$0xf]
    %v139 = vld [vmem:[%s4] sm:$0x1]
    %v141 = vlaneseq
    %v142 = vshrl.u32 %v141, 7
    %v143 = vsub.s32 0, %v142
    %v144 = vrot.slane %v139, %v143
    %v154 = vunpack.c.l.b16 %v131
    %v155 = vunpack.c.l.b16 %v132
    %v156 = vunpack.c.l.b16 %v133
    %v157 = vunpack.c.l.b16 %v134
    %v158 = vunpack.c.l.b16 %v135
    %v159 = vunpack.c.l.b16 %v136
    %v160 = vunpack.c.l.b16 %v137
    %v161 = vunpack.c.l.b16 %v138
    %v162 = vpack.c.b16 %v155, %v154
    %v163 = vpack.c.b16 %v157, %v156
    %v164 = vpack.c.b16 %v159, %v158
    %v165 = vpack.c.b16 %v161, %v160
    %vm170 = vcmask 523264
    %v172 = vsel %vm170, %v130, 0
    %174 = vmatprep.subr.bf16.mxu0 0
    %175 = vmatpush1.bf16.msra.mxu0 0
    %176 = vmatprep.subr.bf16.mxu0 0
    %177 = vmatpush1.bf16.msra.mxu0 0
    %178 = vmatprep.subr.bf16.mxu0 0
    %179 = vmatpush1.bf16.msra.mxu0 0
    %180 = vmatprep.subr.bf16.mxu0 0
    %181 = vmatpush1.bf16.msra.mxu0 0
    %182 = vmatprep.subr.bf16.mxu0 0
    %183 = vmatpush1.bf16.msra.mxu0 %v165
    %184 = vmatprep.subr.bf16.mxu0 0
    %185 = vmatpush1.bf16.msra.mxu0 %v164
    %186 = vmatprep.subr.bf16.mxu0 0
    %187 = vmatpush1.bf16.msra.mxu0 %v163
    %188 = vmatprep.subr.bf16.mxu0 0
    %189 = vmatpush1.bf16.msra.mxu0 %v162
    %190 = vmatprep.subr.bf16.mxu0 0
    %191 = vmatpush2.bf16.msra.mxu0 0
    %192 = vmatprep.subr.bf16.mxu0 0
    %193 = vmatpush2.bf16.msra.mxu0 0
    %194 = vmatprep.subr.bf16.mxu0 0
    %195 = vmatpush2.bf16.msra.mxu0 0
    %196 = vmatprep.subr.bf16.mxu0 0
    %197 = vmatpush2.bf16.msra.mxu0 0
    %198 = vmatprep.subr.bf16.mxu0 0
    %199 = vmatpush2.bf16.msra.mxu0 0
    %200 = vmatprep.subr.bf16.mxu0 0
    %201 = vmatpush2.bf16.msra.mxu0 0
    %202 = vmatprep.subr.bf16.mxu0 0
    %203 = vmatpush2.bf16.msra.mxu0 0
    %204 = vmatprep.subr.bf16.mxu0 0
    %205 = vmatpush2.bf16.msra.mxu0 0
    %206 = vmatprep.mubr.bf16.mxu0 0
    %207 = vmatmul.mubr.bf16.gmra.mxu0 %v172
    %v208 = vpop.f32.mrf.mxu0
    %v209 = vadd.f32 %v144, %v208
    %v210 = vpop.f32.mrf.mxu0
    %v211 = vpop.f32.mrf.mxu0
    %v212 = vpop.f32.mrf.mxu0
    %213 = vdwg.mxu0
    %214 = vst [vmem:[#allocation8] sm:$0xff] %v209
    // Predicated region
    $region34: #{tpu_custom_call.1} parent=1 // pred_check
      _
    $region35: #{tpu_custom_call.1} parent=1 // pred_check_branch
      %216 = sbr.rel (0) target = $region37
    $region36: #{tpu_custom_call.1} parent=1 // pred_region
      %s218 = ssub.s32 128, 128
      %219 = vsyncadd [#allocation4], %s218
      %s221 = sshll.u32 [#allocation8], 4
      %s222 = int_to_ptr.vmem [resolvable:$true] %s221
      %224 = dma.vmem_to_hbm [thread:$0]  %s222, 128, %s5, [#allocation4]
    $region37: #{tpu_custom_call.1} parent=1 // pred_fallthru
      _
    // Predicated region
    $region38: #{tpu_custom_call.1} parent=1 // pred_check
      _
    $region39: #{tpu_custom_call.1} parent=1 // pred_check_branch
      %226 = sbr.rel (0) target = $region41
    $region40: #{tpu_custom_call.1} parent=1 // pred_region
      %227 = dma.done [#allocation4], 128
    $region41: #{tpu_custom_call.1} parent=1 // pred_fallthru
      _
    %228 = vsyncpa [#allocation3], 1
    %229 = vsyncpa [#allocation6], 1
    %230 = vsyncpa [#allocation4], 1

</llo_original>
